<compile_context>
chip_gen: v7x
topology: tpu7x:2x2x1
jax: 0.10.0
libtpu: 0.0.40
codegen_flags: <defaults>
</compile_context>

<pallas_src>
import functools

import jax
import jax.numpy as jnp
from jax import lax
from jax.experimental import pallas as pl
from jax.experimental.pallas import tpu as pltpu


def _round_up(x: int, m: int) -> int:
    return ((x + m - 1) // m) * m


def _mlp_kernel(x_ref, w1_ref, b1_ref, w2_ref, b2_ref, o_ref, *,
                chunk, num_full, tail, unroll):
    # Hoist resident weight / bias loads out of the chunk loop.
    w1 = w1_ref[...]          # (in, 128)  bf16
    w2 = w2_ref[...]          # (128, out) bf16
    b1 = b1_ref[...]          # (1, 128)   f32
    b2 = b2_ref[...]          # (1, out)   f32

    def process(start, rows_n, b1_b, b2_b):
        rows = pl.ds(start, rows_n)
        xs = x_ref[rows, :].astype(jnp.bfloat16)                 # in-kernel cast
        # fc1 (MXU, f32 accumulate) + bias + ReLU (f32 epilogue on VPU).
        h = jnp.dot(xs, w1, preferred_element_type=jnp.float32)
        h = jnp.maximum(h + b1_b, 0.0)
        # fc2 (MXU, bf16 inputs, f32 accumulate) + bias.
        y = jnp.dot(h.astype(jnp.bfloat16), w2, preferred_element_type=jnp.float32)
        o_ref[rows, :] = (y + b2_b).astype(o_ref.dtype)

    if num_full > 0:
        # Hoisted broadcasts (JAX does not CSE broadcast_in_dim inside the loop).
        b1_c = jnp.broadcast_to(b1, (chunk, b1.shape[1]))
        b2_c = jnp.broadcast_to(b2, (chunk, b2.shape[1]))
        if num_full == 1:
            process(0, chunk, b1_c, b2_c)
        else:
            def body(c, carry):
                start = pl.multiple_of(c * chunk, chunk)
                process(start, chunk, b1_c, b2_c)
                return carry
            lax.fori_loop(0, num_full, body, None, unroll=unroll)

    if tail > 0:
        b1_t = jnp.broadcast_to(b1, (tail, b1.shape[1]))
        b2_t = jnp.broadcast_to(b2, (tail, b2.shape[1]))
        process(num_full * chunk, tail, b1_t, b2_t)


def chat_model_forward(x, w1, b1, w2, b2, *, tm_max=2048):
    """x: [B, in] f32; w1: [in,128] bf16; b1: [1,128] f32; w2: [128,out] bf16;
    b2: [1,out] f32.  Returns [B, out] f32 = fc2(relu(fc1(x)))."""
    B, in_size = x.shape
    hidden = w1.shape[1]
    out_size = w2.shape[1]
    b1 = jnp.reshape(b1, (1, hidden)).astype(jnp.float32)
    b2 = jnp.reshape(b2, (1, out_size)).astype(jnp.float32)

    # Batch tiling: tm rows per grid step (multiple of 8).  Force an even grid
    # when >1 so the batch axis splits evenly across v7x's two TensorCores.
    b8 = _round_up(B, 8)
    grid = max(1, pl.cdiv(b8, tm_max))
    if grid > 1 and grid % 2 == 1:
        grid += 1
    tm = _round_up(pl.cdiv(b8, grid), 8)
    grid = pl.cdiv(B, tm)

    # Inner chunking: cap at 256 rows so the (chunk,128) f32 intermediate stays
    # at <=32 vregs (no spill regime).  Ragged remainder handled as a static tail.
    chunk = min(tm, 256)
    num_full = tm // chunk
    tail = tm - num_full * chunk
    unroll = num_full <= 8          # cap full unroll to avoid instruction bloat

    kernel = functools.partial(_mlp_kernel, chunk=chunk, num_full=num_full,
                               tail=tail, unroll=unroll)

    return pl.pallas_call(
        kernel,
        out_shape=jax.ShapeDtypeStruct((B, out_size), jnp.float32),
        grid_spec=pltpu.PrefetchScalarGridSpec(
            num_scalar_prefetch=0,
            grid=(grid,),
            in_specs=[
                pl.BlockSpec((tm, in_size), lambda i: (i, 0)),       # x: tiled over batch
                pl.BlockSpec((in_size, hidden), lambda i: (0, 0)),   # W1: resident
                pl.BlockSpec((1, hidden), lambda i: (0, 0)),         # b1: resident
                pl.BlockSpec((hidden, out_size), lambda i: (0, 0)),  # W2: resident
                pl.BlockSpec((1, out_size), lambda i: (0, 0)),       # b2: resident
            ],
            out_specs=pl.BlockSpec((tm, out_size), lambda i: (i, 0)),
        ),
        compiler_params=pltpu.CompilerParams(
            dimension_semantics=("parallel",),   # shard batch across TCs on v7x
        ),
    )(x, w1, b1, w2, b2)


def init_params(key, input_size, hidden_size, output_size):
    """Deterministic init matching nn.Linear's U(-1/sqrt(fan_in), 1/sqrt(fan_in))."""
    k1, k2, k3, k4 = jax.random.split(key, 4)
    bound1 = 1.0 / (input_size ** 0.5)
    bound2 = 1.0 / (hidden_size ** 0.5)
    w1 = jax.random.uniform(k1, (input_size, hidden_size), jnp.float32, -bound1, bound1)
    b1 = jax.random.uniform(k2, (1, hidden_size), jnp.float32, -bound1, bound1)
    w2 = jax.random.uniform(k3, (hidden_size, output_size), jnp.float32, -bound2, bound2)
    b2 = jax.random.uniform(k4, (1, output_size), jnp.float32, -bound2, bound2)
    return w1, b1, w2, b2


def prepare_params(w1, b1, w2, b2):
    """One-time parameter prep (hoisted out of the forward pass): bf16 weights
    for the MXU, f32 (1, n) biases."""
    return (w1.astype(jnp.bfloat16),
            jnp.reshape(b1, (1, -1)).astype(jnp.float32),
            w2.astype(jnp.bfloat16),
            jnp.reshape(b2, (1, -1)).astype(jnp.float32))


def _reference(x, w1, b1, w2, b2):
    # Same bf16-input / f32-accumulate math as the kernel, in plain JAX.
    h = jnp.dot(x.astype(jnp.bfloat16), w1.astype(jnp.bfloat16),
                preferred_element_type=jnp.float32) + b1
    h = jnp.maximum(h, 0.0)
    y = jnp.dot(h.astype(jnp.bfloat16), w2.astype(jnp.bfloat16),
                preferred_element_type=jnp.float32) + b2
    return y


if __name__ == "__main__":
    INPUT_SIZE, HIDDEN, OUTPUT_SIZE = 32, 128, 16

    key = jax.random.PRNGKey(0)
    kx, kp, kx2, kx3 = jax.random.split(key, 4)
    w1, b1, w2, b2 = init_params(kp, INPUT_SIZE, HIDDEN, OUTPUT_SIZE)
    params = prepare_params(w1, b1, w2, b2)   # one-time bf16 cast, outside forward

    forward = jax.jit(chat_model_forward)

    # Small-shape check (B=8): single grid step, single chunk.
    x_small = jax.random.normal(kx, (8, INPUT_SIZE), jnp.float32)
    out_small = jax.block_until_ready(forward(x_small, *params))
    assert out_small.shape == (8, OUTPUT_SIZE)
    assert jnp.allclose(out_small, _reference(x_small, *params), atol=2e-3, rtol=2e-3)
    ref_f32 = jnp.maximum(x_small @ w1 + b1, 0.0) @ w2 + b2
    assert jnp.allclose(out_small, ref_f32, atol=5e-2, rtol=5e-2)

    # Ragged batch (B=300): exercises masked last rows and the static tail chunk.
    x_rag = jax.random.normal(kx3, (300, INPUT_SIZE), jnp.float32)
    out_rag = jax.block_until_ready(forward(x_rag, *params))
    assert out_rag.shape == (300, OUTPUT_SIZE)
    assert jnp.allclose(out_rag, _reference(x_rag, *params), atol=2e-3, rtol=2e-3)

    # Larger batch (B=2304): two balanced grid steps, unrolled 256-row chunk loop.
    x_big = jax.random.normal(kx2, (2304, INPUT_SIZE), jnp.float32)
    out_big = jax.block_until_ready(forward(x_big, *params))
    assert out_big.shape == (2304, OUTPUT_SIZE)
    assert jnp.allclose(out_big, _reference(x_big, *params), atol=2e-3, rtol=2e-3)

    print("KERNEL_OK")
</pallas_src>

<mosaic_0001>
module attributes {stable_mosaic.version = 11 : i64} {
  func.func @_mlp_kernel(%arg0: i32, %arg1: memref<8x32xf32, #tpu.memory_space<vmem>>, %arg2: memref<32x128xbf16, #tpu.memory_space<vmem>>, %arg3: memref<1x128xf32, #tpu.memory_space<vmem>>, %arg4: memref<128x16xbf16, #tpu.memory_space<vmem>>, %arg5: memref<1x16xf32, #tpu.memory_space<vmem>>, %arg6: memref<8x16xf32, #tpu.memory_space<vmem>>) attributes {dimension_semantics = [#tpu.dimension_semantics<parallel>], iteration_bounds = array<i64: 1>, scalar_prefetch = 0 : i64, scratch_operands = 0 : i64, tpu.core_type = #tpu.core_type<tc>, window_params = [{transform_indices = @transform_0, window_bounds = array<i64: 8, 32>}, {pipeline_mode = #tpu.pipeline_mode<synchronous>, transform_indices = @transform_1, window_bounds = array<i64: 32, 128>}, {pipeline_mode = #tpu.pipeline_mode<synchronous>, transform_indices = @transform_2, window_bounds = array<i64: 1, 128>}, {pipeline_mode = #tpu.pipeline_mode<synchronous>, transform_indices = @transform_3, window_bounds = array<i64: 128, 16>}, {pipeline_mode = #tpu.pipeline_mode<synchronous>, transform_indices = @transform_4, window_bounds = array<i64: 1, 16>}, {transform_indices = @transform_5, window_bounds = array<i64: 8, 16>}]} {
    %c0 = arith.constant 0 : index
    %c0_0 = arith.constant 0 : index
    %0 = vector.load %arg2[%c0, %c0_0] : memref<32x128xbf16, #tpu.memory_space<vmem>>, vector<32x128xbf16>
    %c0_1 = arith.constant 0 : index
    %c0_2 = arith.constant 0 : index
    %1 = vector.load %arg4[%c0_1, %c0_2] : memref<128x16xbf16, #tpu.memory_space<vmem>>, vector<128x16xbf16>
    %c0_3 = arith.constant 0 : index
    %c0_4 = arith.constant 0 : index
    %2 = vector.load %arg3[%c0_3, %c0_4] : memref<1x128xf32, #tpu.memory_space<vmem>>, vector<1x128xf32>
    %c0_5 = arith.constant 0 : index
    %c0_6 = arith.constant 0 : index
    %3 = vector.load %arg5[%c0_5, %c0_6] : memref<1x16xf32, #tpu.memory_space<vmem>>, vector<1x16xf32>
    %4 = vector.shape_cast %2 : vector<1x128xf32> to vector<1x128xf32>
    %5 = vector.broadcast %4 : vector<1x128xf32> to vector<8x128xf32>
    %6 = vector.shape_cast %3 : vector<1x16xf32> to vector<1x16xf32>
    %7 = vector.broadcast %6 : vector<1x16xf32> to vector<8x16xf32>
    %c0_7 = arith.constant 0 : index
    %c0_8 = arith.constant 0 : index
    %8 = vector.load %arg1[%c0_7, %c0_8] : memref<8x32xf32, #tpu.memory_space<vmem>>, vector<8x32xf32>
    %9 = arith.truncf %8 : vector<8x32xf32> to vector<8x32xbf16>
    %cst = arith.constant dense<0.000000e+00> : vector<8x128xf32>
    %10 = tpu.matmul %9, %0, %cst {dimension_numbers = #tpu.dot_dimension_numbers<[1], [0], [0], [1], [0, 0, 1, 1], [], []>} : vector<8x32xbf16>, vector<32x128xbf16>, vector<8x128xf32> -> vector<8x128xf32>
    %11 = arith.addf %10, %5 : vector<8x128xf32>
    %cst_9 = arith.constant 0.000000e+00 : f32
    %12 = vector.broadcast %cst_9 : f32 to vector<8x128xf32>
    %13 = arith.maximumf %11, %12 : vector<8x128xf32>
    %14 = arith.truncf %13 : vector<8x128xf32> to vector<8x128xbf16>
    %cst_10 = arith.constant dense<0.000000e+00> : vector<8x16xf32>
    %15 = tpu.matmul %14, %1, %cst_10 {dimension_numbers = #tpu.dot_dimension_numbers<[1], [0], [0], [1], [0, 0, 1, 1], [], []>} : vector<8x128xbf16>, vector<128x16xbf16>, vector<8x16xf32> -> vector<8x16xf32>
    %16 = arith.addf %15, %7 : vector<8x16xf32>
    %c0_11 = arith.constant 0 : index
    %c0_12 = arith.constant 0 : index
    %17 = vector.load %arg6[%c0_11, %c0_12] : memref<8x16xf32, #tpu.memory_space<vmem>>, vector<8x16xf32>
    tpu.vector_store %arg6[%c0_11, %c0_12], %16 {strides = array<i32>} : memref<8x16xf32, #tpu.memory_space<vmem>>, vector<8x16xf32>,
    return
  }
  func.func @transform_0(%arg0: i32) -> (i32, i32) {
    %c0_i32 = arith.constant 0 : i32
    %c0_i32_0 = arith.constant 0 : i32
    return %arg0, %c0_i32 : i32, i32
  }
  func.func @transform_1(%arg0: i32) -> (i32, i32) {
    %c0_i32 = arith.constant 0 : i32
    %c0_i32_0 = arith.constant 0 : i32
    %c0_i32_1 = arith.constant 0 : i32
    return %c0_i32, %c0_i32_0 : i32, i32
  }
  func.func @transform_2(%arg0: i32) -> (i32, i32) {
    %c0_i32 = arith.constant 0 : i32
    %c0_i32_0 = arith.constant 0 : i32
    %c0_i32_1 = arith.constant 0 : i32
    return %c0_i32, %c0_i32_0 : i32, i32
  }
  func.func @transform_3(%arg0: i32) -> (i32, i32) {
    %c0_i32 = arith.constant 0 : i32
    %c0_i32_0 = arith.constant 0 : i32
    %c0_i32_1 = arith.constant 0 : i32
    return %c0_i32, %c0_i32_0 : i32, i32
  }
  func.func @transform_4(%arg0: i32) -> (i32, i32) {
    %c0_i32 = arith.constant 0 : i32
    %c0_i32_0 = arith.constant 0 : i32
    %c0_i32_1 = arith.constant 0 : i32
    return %c0_i32, %c0_i32_0 : i32, i32
  }
  func.func @transform_5(%arg0: i32) -> (i32, i32) {
    %c0_i32 = arith.constant 0 : i32
    %c0_i32_0 = arith.constant 0 : i32
    return %arg0, %c0_i32 : i32, i32
  }
}

</mosaic_0001>

<llo_original>
// kernel: chat_model_forward.1
$region0: #{chat_model_forward.1}
  #allocation0 [shape = 'u32[]', space=smem, size = 0x4, offset = 0x4, fixed_abs, tag = 'smem constant byte address 0x4 - core index']
  #allocation1 [shape = 'u32[144,128]{1,0:T(1,128)}', space=vmem, size = 0x12000, scoped, tag = 'internal scratch']
  %s0 = inlined_call_operand.vmem [shape: f32[8,32], index: 0, kind: input, shape index: {}]
  %s1 = inlined_call_operand.vmem [shape: bf16[32,128], index: 1, kind: input, shape index: {}]
  %s2 = inlined_call_operand.vmem [shape: f32[1,128], index: 2, kind: input, shape index: {}]
  %s3 = inlined_call_operand.vmem [shape: bf16[128,16], index: 3, kind: input, shape index: {}]
  %s4 = inlined_call_operand.vmem [shape: f32[1,16], index: 4, kind: input, shape index: {}]
  %s5 = inlined_call_operand.hbm [shape: f32[8,16], index: 5, kind: output, shape index: {}]
  %s6 = sld [smem:[#allocation0]]
  $region30: #{chat_model_forward.1} parent=0
    _
  %s8 = ssub.s32 1, %s6
  %s9 = scalar_select 0, %s8, %s6
  $region1: #{chat_model_forward.1} parent=0
    #allocation2 [shape = 'u8[4096]{0}', space=vmem, size = 0x1000, scoped, tag = 'output window, operand 0, single buffered']
    #allocation3 [shape = 's32[1]{0}', space=sflag, size = 0x4, scoped, tag = 'scoped memory for chat_model_forward.1']
    %10 = vsyncpa [#allocation3], 0
    // Predicated region
    $region2: #{chat_model_forward.1} parent=1 // pred_check
      _
    $region3: #{chat_model_forward.1} parent=1 // pred_check_branch
      %12 = sbr.rel (0) target = $region5
    $region4: #{chat_model_forward.1} parent=1 // pred_region
      _
    $region5: #{chat_model_forward.1} parent=1 // pred_fallthru
      _
    // Predicated region
    $region6: #{chat_model_forward.1} parent=1 // pred_check
      _
    $region7: #{chat_model_forward.1} parent=1 // pred_check_branch
      %14 = sbr.rel (0) target = $region9
    $region8: #{chat_model_forward.1} parent=1 // pred_region
      _
    $region9: #{chat_model_forward.1} parent=1 // pred_fallthru
      _
    // Predicated region
    $region10: #{chat_model_forward.1} parent=1 // pred_check
      _
    $region11: #{chat_model_forward.1} parent=1 // pred_check_branch
      %16 = sbr.rel (0) target = $region13
    $region12: #{chat_model_forward.1} parent=1 // pred_region
      _
    $region13: #{chat_model_forward.1} parent=1 // pred_fallthru
      _
    // Predicated region
    $region14: #{chat_model_forward.1} parent=1 // pred_check
      _
    $region15: #{chat_model_forward.1} parent=1 // pred_check_branch
      %18 = sbr.rel (0) target = $region17
    $region16: #{chat_model_forward.1} parent=1 // pred_region
      _
    $region17: #{chat_model_forward.1} parent=1 // pred_fallthru
      _
    // Predicated region
    $region18: #{chat_model_forward.1} parent=1 // pred_check
      _
    $region19: #{chat_model_forward.1} parent=1 // pred_check_branch
      %20 = sbr.rel (0) target = $region21
    $region20: #{chat_model_forward.1} parent=1 // pred_region
      _
    $region21: #{chat_model_forward.1} parent=1 // pred_fallthru
      _
    %v22 = vld [vmem:[%s1] sm:$0xf]
    %v23 = vld [vmem:[%s1 + $0x4] sm:$0xf]
    %v24 = vld [vmem:[%s1 + $0x8] sm:$0xf]
    %v25 = vld [vmem:[%s1 + $0xc] sm:$0xf]
    %v26 = vld [vmem:[%s3] sm:$0xf]
    %v27 = vld [vmem:[%s3 + $0x4] sm:$0xf]
    %v28 = vld [vmem:[%s3 + $0x8] sm:$0xf]
    %v29 = vld [vmem:[%s3 + $0xc] sm:$0xf]
    %v30 = vld [vmem:[%s3 + $0x10] sm:$0xf]
    %v31 = vld [vmem:[%s3 + $0x14] sm:$0xf]
    %v32 = vld [vmem:[%s3 + $0x18] sm:$0xf]
    %v33 = vld [vmem:[%s3 + $0x1c] sm:$0xf]
    %v34 = vld [vmem:[%s3 + $0x20] sm:$0xf]
    %v35 = vld [vmem:[%s3 + $0x24] sm:$0xf]
    %v36 = vld [vmem:[%s3 + $0x28] sm:$0xf]
    %v37 = vld [vmem:[%s3 + $0x2c] sm:$0xf]
    %v38 = vld [vmem:[%s3 + $0x30] sm:$0xf]
    %v39 = vld [vmem:[%s3 + $0x34] sm:$0xf]
    %v40 = vld [vmem:[%s3 + $0x38] sm:$0xf]
    %v41 = vld [vmem:[%s3 + $0x3c] sm:$0xf]
    %v42 = vld [vmem:[%s2] sm:$0x1]
    %v43 = vld [vmem:[%s4] sm:$0x1]
    %v45 = vlaneseq
    %v46 = vshrl.u32 %v45, 7
    %v47 = vsub.s32 0, %v46
    %v48 = vrot.slane %v42, %v47
    %v51 = vlaneseq
    %v52 = vshrl.u32 %v51, 7
    %v53 = vsub.s32 0, %v52
    %v54 = vrot.slane %v43, %v53
    %v56 = vld [vmem:[%s0] sm:$0xff]
    %v57 = vpack.c.bf16 %v56, %v56
    %v62 = vunpack.c.l.b16 %v22
    %v63 = vunpack.c.l.b16 %v23
    %v64 = vunpack.c.l.b16 %v24
    %v65 = vunpack.c.l.b16 %v25
    %v66 = vpack.c.b16 %v63, %v62
    %v67 = vpack.c.b16 %v65, %v64
    %vm70 = vcmask 261120
    %v72 = vsel %vm70, %v57, 0
    %74 = vmatprep.subr.bf16.mxu0 0
    %75 = vmatpush1.bf16.msra.mxu0 %v66
    %76 = vmatprep.subr.bf16.mxu0 0
    %77 = vmatpush1.bf16.msra.mxu0 %v67
    %78 = vmatprep.subr.bf16.mxu0 0
    %79 = vmatpush1.bf16.msra.mxu0 0
    %80 = vmatprep.subr.bf16.mxu0 0
    %81 = vmatpush1.bf16.msra.mxu0 0
    %82 = vmatprep.subr.bf16.mxu0 0
    %83 = vmatpush1.bf16.msra.mxu0 0
    %84 = vmatprep.subr.bf16.mxu0 0
    %85 = vmatpush1.bf16.msra.mxu0 0
    %86 = vmatprep.subr.bf16.mxu0 0
    %87 = vmatpush1.bf16.msra.mxu0 0
    %88 = vmatprep.subr.bf16.mxu0 0
    %89 = vmatpush1.bf16.msra.mxu0 0
    %90 = vmatprep.subr.bf16.mxu0 0
    %91 = vmatpush1.bf16.msra.mxu0 0
    %92 = vmatprep.subr.bf16.mxu0 0
    %93 = vmatpush1.bf16.msra.mxu0 0
    %94 = vmatprep.subr.bf16.mxu0 0
    %95 = vmatpush1.bf16.msra.mxu0 0
    %96 = vmatprep.subr.bf16.mxu0 0
    %97 = vmatpush1.bf16.msra.mxu0 0
    %98 = vmatprep.subr.bf16.mxu0 0
    %99 = vmatpush1.bf16.msra.mxu0 0
    %100 = vmatprep.subr.bf16.mxu0 0
    %101 = vmatpush1.bf16.msra.mxu0 0
    %102 = vmatprep.subr.bf16.mxu0 0
    %103 = vmatpush1.bf16.msra.mxu0 0
    %104 = vmatprep.subr.bf16.mxu0 0
    %105 = vmatpush1.bf16.msra.mxu0 0
    %106 = vmatprep.mubr.bf16.mxu0 0
    %107 = vmatmul.mubr.bf16.gmra.mrb[0].mxu0 %v72
    %v108 = vpop.f32.mrb[0].mxu0
    %v109 = vadd.f32 %v48, %v108
    %v110 = vpop.f32.mrb[0].mxu0
    %v111 = vpop.f32.mrb[0].mxu0
    %v112 = vpop.f32.mrb[0].mxu0
    %113 = vdwg.mxu0
    %v114 = vmax.f32 %v109, 0.0
    %v115 = vpack.c.bf16 %v114, %v114
    %v132 = vunpack.c.l.b16 %v26
    %v133 = vunpack.c.l.b16 %v27
    %v134 = vunpack.c.l.b16 %v28
    %v135 = vunpack.c.l.b16 %v29
    %v136 = vunpack.c.l.b16 %v30
    %v137 = vunpack.c.l.b16 %v31
    %v138 = vunpack.c.l.b16 %v32
    %v139 = vunpack.c.l.b16 %v33
    %v140 = vunpack.c.l.b16 %v34
    %v141 = vunpack.c.l.b16 %v35
    %v142 = vunpack.c.l.b16 %v36
    %v143 = vunpack.c.l.b16 %v37
    %v144 = vunpack.c.l.b16 %v38
    %v145 = vunpack.c.l.b16 %v39
    %v146 = vunpack.c.l.b16 %v40
    %v147 = vunpack.c.l.b16 %v41
    %v148 = vpack.c.b16 %v133, %v132
    %v149 = vpack.c.b16 %v135, %v134
    %v150 = vpack.c.b16 %v137, %v136
    %v151 = vpack.c.b16 %v139, %v138
    %v152 = vpack.c.b16 %v141, %v140
    %v153 = vpack.c.b16 %v143, %v142
    %v154 = vpack.c.b16 %v145, %v144
    %v155 = vpack.c.b16 %v147, %v146
    %164 = vmatprep.subr.bf16.mxu0 0
    %165 = vmatpush1.bf16.msra.mxu0 %v148
    %166 = vmatprep.subr.bf16.mxu0 0
    %167 = vmatpush1.bf16.msra.mxu0 %v149
    %168 = vmatprep.subr.bf16.mxu0 0
    %169 = vmatpush1.bf16.msra.mxu0 %v150
    %170 = vmatprep.subr.bf16.mxu0 0
    %171 = vmatpush1.bf16.msra.mxu0 %v151
    %172 = vmatprep.subr.bf16.mxu0 0
    %173 = vmatpush1.bf16.msra.mxu0 %v152
    %174 = vmatprep.subr.bf16.mxu0 0
    %175 = vmatpush1.bf16.msra.mxu0 %v153
    %176 = vmatprep.subr.bf16.mxu0 0
    %177 = vmatpush1.bf16.msra.mxu0 %v154
    %178 = vmatprep.subr.bf16.mxu0 0
    %179 = vmatpush1.bf16.msra.mxu0 %v155
    %180 = vmatprep.subr.bf16.mxu0 0
    %181 = vmatpush1.bf16.msra.mxu0 0
    %182 = vmatprep.subr.bf16.mxu0 0
    %183 = vmatpush1.bf16.msra.mxu0 0
    %184 = vmatprep.subr.bf16.mxu0 0
    %185 = vmatpush1.bf16.msra.mxu0 0
    %186 = vmatprep.subr.bf16.mxu0 0
    %187 = vmatpush1.bf16.msra.mxu0 0
    %188 = vmatprep.subr.bf16.mxu0 0
    %189 = vmatpush1.bf16.msra.mxu0 0
    %190 = vmatprep.subr.bf16.mxu0 0
    %191 = vmatpush1.bf16.msra.mxu0 0
    %192 = vmatprep.subr.bf16.mxu0 0
    %193 = vmatpush1.bf16.msra.mxu0 0
    %194 = vmatprep.subr.bf16.mxu0 0
    %195 = vmatpush1.bf16.msra.mxu0 0
    %196 = vmatprep.mubr.bf16.mxu0 0
    %197 = vmatmul.mubr.bf16.gmra.mrb[0].mxu0 %v115
    %v198 = vpop.f32.mrb[0].mxu0
    %v199 = vadd.f32 %v54, %v198
    %v200 = vpop.f32.mrb[0].mxu0
    %v201 = vpop.f32.mrb[0].mxu0
    %v202 = vpop.f32.mrb[0].mxu0
    %203 = vdwg.mxu0
    %vm204 = vcmask 130048
    %205 = vst.msk [vmem:[#allocation2] sm:$0xff] %vm204, %v199
    // Predicated region
    $region22: #{chat_model_forward.1} parent=1 // pred_check
      _
    $region23: #{chat_model_forward.1} parent=1 // pred_check_branch
      %207 = sbr.rel (0) target = $region25
    $region24: #{chat_model_forward.1} parent=1 // pred_region
      %s209 = ssub.s32 128, 128
      %210 = vsyncadd [#allocation3], %s209
      %s212 = sshll.u32 [#allocation2], 4
      %s213 = int_to_ptr.vmem [resolvable:$true] %s212
      %215 = dma.vmem_to_hbm [thread:$0]  %s213, 128, %s5, [#allocation3]
    $region25: #{chat_model_forward.1} parent=1 // pred_fallthru
      _
    // Predicated region
    $region26: #{chat_model_forward.1} parent=1 // pred_check
      _
    $region27: #{chat_model_forward.1} parent=1 // pred_check_branch
      %217 = sbr.rel (0) target = $region29
    $region28: #{chat_model_forward.1} parent=1 // pred_region
      %218 = dma.done [#allocation3], 128
    $region29: #{chat_model_forward.1} parent=1 // pred_fallthru
      _
    %219 = vsyncpa [#allocation3], 1

</llo_original>
